<compile_context>
chip_gen: v5e
topology: v5e:2x2
jax: 0.10.0
libtpu: 0.0.40
codegen_flags: <defaults>
</compile_context>

<pallas_src>
from functools import partial

import jax
import jax.numpy as jnp
from jax.experimental import pallas as pl
from jax.experimental.pallas import tpu as pltpu


_LANES = 512            # lane-dense last dim (multiple of 128)
_MAX_TILE_ROWS = 1024   # 1024 * 512 * 4 B = 2 MiB per f32 block


def _round_up(a: int, b: int) -> int:
    return ((a + b - 1) // b) * b


def _normalize_kernel(x_ref, o_ref, *, mean_zero: bool):
    x = x_ref[...].astype(jnp.float32)
    y = x * (1.0 / 255.0)
    if mean_zero:
        y = y - 0.5
    o_ref[...] = y.astype(o_ref.dtype)


def normalize_img(x, mean_zero: bool = False, out_dtype=None):
    """Pallas equivalent of NormalizeImg(mean_zero).forward(x)."""
    orig_shape = x.shape
    total = int(x.size)
    if out_dtype is None:
        out_dtype = x.dtype if jnp.issubdtype(x.dtype, jnp.floating) else jnp.float32
    out_dtype = jnp.dtype(out_dtype)

    # Lane-dense 2D layout: (rows, _LANES).  Keep the row count unpadded when
    # possible; the last grid block may be partial (Pallas masks OOB stores).
    rows = pl.cdiv(total, _LANES)
    if rows < 8:
        rows_eff = 8                                    # tiny input: pad to one (8,512) tile
        tile_r = 8
    else:
        rows_eff = rows
        tile_r = min(_MAX_TILE_ROWS, (rows // 8) * 8)   # multiple of 8, <= rows

    padded_total = rows_eff * _LANES
    flat = x.reshape(-1)
    if padded_total != total:
        # TODO(synk): this pad (and the slice below) costs one extra HBM copy;
        # only hit when total is not a multiple of 512 or the input is tiny.
        flat = jnp.pad(flat, (0, padded_total - total))
    x2d = flat.reshape(rows_eff, _LANES)

    grid = (pl.cdiv(rows_eff, tile_r),)
    kernel = partial(_normalize_kernel, mean_zero=mean_zero)

    in_bytes = total * jnp.dtype(x.dtype).itemsize
    out_bytes = total * out_dtype.itemsize
    cost = pl.CostEstimate(
        flops=2 * total, transcendentals=0, bytes_accessed=in_bytes + out_bytes
    )

    out2d = pl.pallas_call(
        kernel,
        out_shape=jax.ShapeDtypeStruct((rows_eff, _LANES), out_dtype),
        grid=grid,
        in_specs=[pl.BlockSpec((tile_r, _LANES), lambda i: (i, 0))],
        out_specs=pl.BlockSpec((tile_r, _LANES), lambda i: (i, 0)),
        compiler_params=pltpu.CompilerParams(
            dimension_semantics=("parallel",),
            vmem_limit_bytes=32 * 1024 * 1024,
        ),
        cost_estimate=cost,
    )(x2d)

    out_flat = out2d.reshape(-1)
    if padded_total != total:
        out_flat = out_flat[:total]
    return out_flat.reshape(orig_shape)


if __name__ == "__main__":
    key = jax.random.PRNGKey(0)

    # Image-like input in [0, 255), NCHW, small shape.
    x = jax.random.uniform(key, (2, 4, 16, 16), dtype=jnp.float32) * 255.0

    # mean_zero = False
    y = jax.block_until_ready(normalize_img(x, mean_zero=False))
    ref = x / 255.0
    assert y.shape == x.shape and y.dtype == x.dtype
    assert jnp.allclose(y, ref, atol=1e-6, rtol=1e-6), "mismatch (mean_zero=False)"

    # mean_zero = True
    y2 = jax.block_until_ready(normalize_img(x, mean_zero=True))
    ref2 = x / 255.0 - 0.5
    assert jnp.allclose(y2, ref2, atol=1e-6, rtol=1e-6), "mismatch (mean_zero=True)"

    # Non-divisible shape exercises the padding / tail path.
    x3 = jax.random.uniform(jax.random.PRNGKey(0), (2, 3, 15, 17), dtype=jnp.float32) * 255.0
    y3 = jax.block_until_ready(normalize_img(x3, mean_zero=True))
    ref3 = x3 / 255.0 - 0.5
    assert jnp.allclose(y3, ref3, atol=1e-6, rtol=1e-6), "mismatch (odd shape)"

    # Multiple of 512 but rows not a multiple of tile_r -> no-pad partial-block path.
    x5 = jax.random.uniform(key, (5, 7, 512), dtype=jnp.float32) * 255.0
    y5 = jax.block_until_ready(normalize_img(x5, mean_zero=True))
    ref5 = x5 / 255.0 - 0.5
    assert jnp.allclose(y5, ref5, atol=1e-6, rtol=1e-6), "mismatch (partial block)"

    # uint8 input path (cast to f32 inside the kernel).
    x4 = (jax.random.uniform(key, (2, 4, 16, 16)) * 255.0).astype(jnp.uint8)
    y4 = jax.block_until_ready(normalize_img(x4, mean_zero=False))
    ref4 = x4.astype(jnp.float32) / 255.0
    assert y4.dtype == jnp.float32
    assert jnp.allclose(y4, ref4, atol=1e-6, rtol=1e-6), "mismatch (uint8 input)"

    print("KERNEL_OK")
</pallas_src>

<mosaic_0001>
module attributes {stable_mosaic.version = 11 : i64} {
  func.func @_normalize_kernel(%arg0: i32, %arg1: memref<8x512xf32, #tpu.memory_space<vmem>>, %arg2: memref<8x512xf32, #tpu.memory_space<vmem>>) attributes {dimension_semantics = [#tpu.dimension_semantics<parallel>], iteration_bounds = array<i64: 1>, scalar_prefetch = 0 : i64, scratch_operands = 0 : i64, tpu.core_type = #tpu.core_type<tc>, window_params = [{transform_indices = @transform_0, window_bounds = array<i64: 8, 512>}, {transform_indices = @transform_1, window_bounds = array<i64: 8, 512>}]} {
    %c0 = arith.constant 0 : index
    %c0_0 = arith.constant 0 : index
    %0 = vector.load %arg1[%c0, %c0_0] : memref<8x512xf32, #tpu.memory_space<vmem>>, vector<8x512xf32>
    %cst = arith.constant 0.00392156886 : f32
    %1 = vector.broadcast %cst : f32 to vector<8x512xf32>
    %2 = arith.mulf %0, %1 : vector<8x512xf32>
    %c0_1 = arith.constant 0 : index
    %c0_2 = arith.constant 0 : index
    %3 = vector.load %arg2[%c0_1, %c0_2] : memref<8x512xf32, #tpu.memory_space<vmem>>, vector<8x512xf32>
    tpu.vector_store %arg2[%c0_1, %c0_2], %2 {strides = array<i32>} : memref<8x512xf32, #tpu.memory_space<vmem>>, vector<8x512xf32>,
    return
  }
  func.func @transform_0(%arg0: i32) -> (i32, i32) {
    %c0_i32 = arith.constant 0 : i32
    %c0_i32_0 = arith.constant 0 : i32
    return %arg0, %c0_i32 : i32, i32
  }
  func.func @transform_1(%arg0: i32) -> (i32, i32) {
    %c0_i32 = arith.constant 0 : i32
    %c0_i32_0 = arith.constant 0 : i32
    return %arg0, %c0_i32 : i32, i32
  }
}

</mosaic_0001>

<llo_original>
// kernel: tpu_custom_call.1
$region0: #{tpu_custom_call.1}
  #allocation0 [shape = 'u32[]', space=smem, size = 0x4, offset = 0x4, fixed_abs, tag = 'smem constant byte address 0x4 - core index']
  #allocation1 [shape = 'u32[72,128]{1,0:T(1,128)}', space=vmem, size = 0x9000, scoped, tag = 'internal scratch']
  %s0 = inlined_call_operand.hbm [shape: f32[8,512], index: 0, kind: input, shape index: {}]
  %s1 = inlined_call_operand.hbm [shape: f32[8,512], index: 1, kind: output, shape index: {}]
  %s2 = sld [smem:[#allocation0]]
  $region18: #{tpu_custom_call.1} parent=0
    _
  %s4 = ssub.s32 1, %s2
  %s5 = scalar_select 0, %s4, %s2
  $region1: #{tpu_custom_call.1} parent=0
    #allocation2 [shape = 'u8[16384]{0}', space=vmem, size = 0x4000, scoped, tag = 'input window, operand 0, single buffered']
    #allocation3 [shape = 's32[1]{0}', space=sflag, size = 0x4, scoped, tag = 'scoped memory for tpu_custom_call.1']
    #allocation4 [shape = 's32[1]{0}', space=sflag, size = 0x4, scoped, tag = 'scoped memory for tpu_custom_call.1']
    #allocation5 [shape = 'u8[16384]{0}', space=vmem, size = 0x4000, scoped, tag = 'output window, operand 0, single buffered']
    %6 = vsyncpa [#allocation3], 0
    %7 = vsyncpa [#allocation4], 0
    // Predicated region
    $region2: #{tpu_custom_call.1} parent=1 // pred_check
      _
    $region3: #{tpu_custom_call.1} parent=1 // pred_check_branch
      %9 = sbr.rel (0) target = $region5
    $region4: #{tpu_custom_call.1} parent=1 // pred_region
      %11 = vsyncadd [#allocation3], 0
      %s13 = sshll.u32 %s0, 4
      %s14 = int_to_ptr.hbm [resolvable:$true] %s13
      %s15 = sshll.u32 [#allocation2], 4
      %s16 = int_to_ptr.vmem [resolvable:$true] %s15
      %18 = dma.hbm_to_vmem [thread:$0]  %s14, 512, %s16, [#allocation3]
    $region5: #{tpu_custom_call.1} parent=1 // pred_fallthru
      _
    // Predicated region
    $region6: #{tpu_custom_call.1} parent=1 // pred_check
      _
    $region7: #{tpu_custom_call.1} parent=1 // pred_check_branch
      %20 = sbr.rel (0) target = $region9
    $region8: #{tpu_custom_call.1} parent=1 // pred_region
      %22 = dma.done [#allocation3], 512
    $region9: #{tpu_custom_call.1} parent=1 // pred_fallthru
      _
    %v23 = vld [vmem:[#allocation2] sm:$0xff]
    %v24 = vld [vmem:[#allocation2 + $0x8] sm:$0xff]
    %v25 = vld [vmem:[#allocation2 + $0x10] sm:$0xff]
    %v26 = vld [vmem:[#allocation2 + $0x18] sm:$0xff]
    %v27 = vmul.f32 %v23, 0.003921569
    %v28 = vmul.f32 %v24, 0.003921569
    %v29 = vmul.f32 %v25, 0.003921569
    %v30 = vmul.f32 %v26, 0.003921569
    %31 = vst [vmem:[#allocation5] sm:$0xff] %v27
    %32 = vst [vmem:[#allocation5 + $0x8] sm:$0xff] %v28
    %33 = vst [vmem:[#allocation5 + $0x10] sm:$0xff] %v29
    %34 = vst [vmem:[#allocation5 + $0x18] sm:$0xff] %v30
    // Predicated region
    $region10: #{tpu_custom_call.1} parent=1 // pred_check
      _
    $region11: #{tpu_custom_call.1} parent=1 // pred_check_branch
      %36 = sbr.rel (0) target = $region13
    $region12: #{tpu_custom_call.1} parent=1 // pred_region
      %38 = vsyncadd [#allocation4], 0
      %s40 = sshll.u32 [#allocation5], 4
      %s41 = int_to_ptr.vmem [resolvable:$true] %s40
      %s42 = sshll.u32 %s1, 4
      %s43 = int_to_ptr.hbm [resolvable:$true] %s42
      %45 = dma.vmem_to_hbm [thread:$0]  %s41, 512, %s43, [#allocation4]
    $region13: #{tpu_custom_call.1} parent=1 // pred_fallthru
      _
    // Predicated region
    $region14: #{tpu_custom_call.1} parent=1 // pred_check
      _
    $region15: #{tpu_custom_call.1} parent=1 // pred_check_branch
      %47 = sbr.rel (0) target = $region17
    $region16: #{tpu_custom_call.1} parent=1 // pred_region
      %49 = dma.done [#allocation4], 512
    $region17: #{tpu_custom_call.1} parent=1 // pred_fallthru
      _
    %50 = vsyncpa [#allocation3], 1
    %51 = vsyncpa [#allocation4], 1

</llo_original>
